<compile_context>
chip_gen: v7x
topology: tpu7x:2x2x1
jax: 0.10.0
libtpu: 0.0.40
codegen_flags: <defaults>
</compile_context>

<pallas_src>
import jax
import jax.numpy as jnp
from jax.experimental import pallas as pl
from jax.experimental.pallas import tpu as pltpu

LANES = 128     # vreg lane width (last dim of every tile)
MAX_TM = 2048   # rows per tile: 2048 * 128 * 4 B = 1 MiB per VMEM buffer


def _round_up(v, m):
    return ((v + m - 1) // m) * m


def _sublane_multiple(dtype):
    # Minimum second-to-last tile dim: 8 for 4-byte, 16 for 2-byte, 32 for 1-byte.
    return max(8, 32 // jnp.dtype(dtype).itemsize)


def _linear11_kernel(x_ref, w_ref, b_ref, o_ref):
    # x_ref/o_ref: (tm, 128) VMEM tiles; w_ref: (1, 1) SMEM; b_ref: (1,) SMEM.
    # HBM-bandwidth bound: keep the body at 1 vld + 1-2 VALU ops + 1 vst per vreg.
    o_ref[...] = x_ref[...] * w_ref[0, 0] + b_ref[0]


def _run_slab(x2d, weight, bias, *, alias_input):
    """Run the affine kernel over a lane-dense (rows, 128) slab."""
    rows, _ = x2d.shape
    sub = _sublane_multiple(x2d.dtype)
    # Aim for >= 2 tiles (v7x megacore) while capping each VMEM buffer at ~1 MiB.
    tm = min(MAX_TM, _round_up(max(pl.cdiv(rows, 2), 1), sub))
    tm = max(tm, sub)
    grid = (pl.cdiv(rows, tm),)   # ragged last block is masked by Pallas

    return pl.pallas_call(
        _linear11_kernel,
        out_shape=jax.ShapeDtypeStruct((rows, LANES), x2d.dtype),
        grid=grid,
        in_specs=[
            pl.BlockSpec((tm, LANES), lambda i: (i, 0)),            # x tiles (VMEM)
            pl.BlockSpec(memory_space=pltpu.MemorySpace.SMEM),      # weight scalar
            pl.BlockSpec(memory_space=pltpu.MemorySpace.SMEM),      # bias scalar
        ],
        out_specs=pl.BlockSpec((tm, LANES), lambda i: (i, 0)),      # y tiles (VMEM)
        input_output_aliases=({0: 0} if alias_input else {}),
        compiler_params=pltpu.CompilerParams(
            dimension_semantics=("parallel",),
        ),
    )(x2d, weight, bias)


def linear_model_forward(x, weight, bias):
    """Forward pass of LinearModel: y = x @ weight.T + bias.

    x:      (N, 1) float32
    weight: (1, 1) float32   (torch nn.Linear weight, shape (out, in))
    bias:   (1,)   float32
    returns (N, 1) float32
    """
    n, in_features = x.shape
    assert in_features == 1 and weight.shape == (1, 1) and bias.shape == (1,)
    dtype = x.dtype
    sub = _sublane_multiple(dtype)

    # ---- Tiny-N fast path: fixed kernel overhead dominates; use fused XLA ----
    if n < LANES * sub:
        return x * weight[0, 0] + bias[0]

    rows = pl.cdiv(n, LANES)

    if n % LANES == 0:
        # ---- Zero-copy path: contiguous reshape in/out, no pad, no slice ----
        x2d = x.reshape(rows, LANES)
        y2d = _run_slab(x2d, weight, bias, alias_input=False)
        return y2d.reshape(n, 1)

    # ---- Ragged N: pad only the tail row(s) (<= sub*128 - 1 elements), not a
    #      whole tile; the padded slab is a fresh temp so aliasing it is free.
    rows_pad = _round_up(rows, sub)
    n_pad = rows_pad * LANES
    x_flat = jnp.pad(x.reshape(-1), (0, n_pad - n))   # don't-care padding
    x2d = x_flat.reshape(rows_pad, LANES)
    y2d = _run_slab(x2d, weight, bias, alias_input=True)
    return y2d.reshape(-1)[:n].reshape(n, 1)


if __name__ == "__main__":
    key = jax.random.PRNGKey(0)
    kx, kw, kb = jax.random.split(key, 3)

    # Deterministic parameter init (same uniform range torch uses: U(-1, 1)
    # since fan_in = 1 => bound = 1/sqrt(1) = 1).
    weight = jax.random.uniform(kw, (1, 1), dtype=jnp.float32, minval=-1.0, maxval=1.0)
    bias = jax.random.uniform(kb, (1,), dtype=jnp.float32, minval=-1.0, maxval=1.0)

    # N=4096 exercises the zero-copy Pallas path (2 tiles -> both v7x cores),
    # N=5000 the ragged Pallas path (masked last block + aliased padded temp),
    # N=8 the tiny-N plain-JAX fallback.
    for n in (4096, 5000, 8):
        x = jax.random.normal(kx, (n, 1), dtype=jnp.float32)
        y = linear_model_forward(x, weight, bias)
        jax.block_until_ready(y)

        y_ref = x @ weight.T + bias   # pure-JAX reference
        assert y.shape == (n, 1)
        assert jnp.allclose(y, y_ref, atol=1e-6, rtol=1e-6), f"mismatch at N={n}"

    print("KERNEL_OK")
</pallas_src>

<mosaic_0001>
module attributes {stable_mosaic.version = 11 : i64} {
  func.func @_linear11_kernel(%arg0: i32, %arg1: memref<16x128xf32, #tpu.memory_space<vmem>>, %arg2: memref<1x1xf32, #tpu.memory_space<smem>>, %arg3: memref<1xf32, #tpu.memory_space<smem>>, %arg4: memref<16x128xf32, #tpu.memory_space<vmem>>) attributes {dimension_semantics = [#tpu.dimension_semantics<parallel>], iteration_bounds = array<i64: 2>, scalar_prefetch = 0 : i64, scratch_operands = 0 : i64, tpu.core_type = #tpu.core_type<tc>, window_params = [{transform_indices = @transform_0, window_bounds = array<i64: 16, 128>}, {transform_indices = @transform_1, window_bounds = array<i64: 1, 1>}, {transform_indices = @transform_2, window_bounds = array<i64: 1>}, {transform_indices = @transform_3, window_bounds = array<i64: 16, 128>}]} {
    %c0 = arith.constant 0 : index
    %c0_0 = arith.constant 0 : index
    %0 = vector.load %arg1[%c0, %c0_0] : memref<16x128xf32, #tpu.memory_space<vmem>>, vector<16x128xf32>
    %c0_1 = arith.constant 0 : index
    %c0_2 = arith.constant 0 : index
    %1 = memref.load %arg2[%c0_1, %c0_2] : memref<1x1xf32, #tpu.memory_space<smem>>
    %2 = vector.broadcast %1 : f32 to vector<16x128xf32>
    %3 = arith.mulf %0, %2 : vector<16x128xf32>
    %c0_3 = arith.constant 0 : index
    %4 = memref.load %arg3[%c0_3] : memref<1xf32, #tpu.memory_space<smem>>
    %5 = vector.broadcast %4 : f32 to vector<16x128xf32>
    %6 = arith.addf %3, %5 : vector<16x128xf32>
    %c0_4 = arith.constant 0 : index
    %c0_5 = arith.constant 0 : index
    %7 = vector.load %arg4[%c0_4, %c0_5] : memref<16x128xf32, #tpu.memory_space<vmem>>, vector<16x128xf32>
    tpu.vector_store %arg4[%c0_4, %c0_5], %6 {strides = array<i32>} : memref<16x128xf32, #tpu.memory_space<vmem>>, vector<16x128xf32>,
    return
  }
  func.func @transform_0(%arg0: i32) -> (i32, i32) {
    %c0_i32 = arith.constant 0 : i32
    %c0_i32_0 = arith.constant 0 : i32
    return %arg0, %c0_i32 : i32, i32
  }
  func.func @transform_1(%arg0: i32) -> (i32, i32) {
    %c0_i32 = arith.constant 0 : i32
    %c0_i32_0 = arith.constant 0 : i32
    %c0_i32_1 = arith.constant 0 : i32
    return %c0_i32, %c0_i32_0 : i32, i32
  }
  func.func @transform_2(%arg0: i32) -> i32 {
    %c0_i32 = arith.constant 0 : i32
    %c0_i32_0 = arith.constant 0 : i32
    return %c0_i32 : i32
  }
  func.func @transform_3(%arg0: i32) -> (i32, i32) {
    %c0_i32 = arith.constant 0 : i32
    %c0_i32_0 = arith.constant 0 : i32
    return %arg0, %c0_i32 : i32, i32
  }
}

</mosaic_0001>

<llo_original>
// kernel: tpu_custom_call.1
$region0: #{tpu_custom_call.1}
  #allocation0 [shape = 'u32[]', space=smem, size = 0x4, offset = 0x4, fixed_abs, tag = 'smem constant byte address 0x4 - core index']
  #allocation1 [shape = 'u32[144,128]{1,0:T(1,128)}', space=vmem, size = 0x12000, scoped, tag = 'internal scratch']
  #allocation2 [shape = 'f32[1,1]{1,0:T(1,128)S(6)}', space=smem, size = 0x200, scoped, tag = 'scoped memory for tpu_custom_call.1']
  #allocation3 [shape = 'f32[1]{0:T(128)S(6)}', space=smem, size = 0x200, scoped, tag = 'scoped memory for tpu_custom_call.1']
  %s0 = inlined_call_operand.hbm [shape: f32[32,128], index: 0, kind: input, shape index: {}]
  %s1 = inlined_call_operand.<no memory space> [shape: f32[1,1], index: 1, kind: input, shape index: {}]
  %s2 = inlined_call_operand.<no memory space> [shape: f32[1], index: 2, kind: input, shape index: {}]
  %s3 = inlined_call_operand.hbm [shape: f32[32,128], index: 3, kind: output, shape index: {}]
  %s4 = sld [smem:[#allocation0]]
  $region49: #{tpu_custom_call.1} parent=0
    _
  %s6 = ssub.s32 1, %s4
  %s7 = scalar_select 0, %s6, %s4
  %8 = sst [smem:[#allocation2]] %s1
  %9 = sst [smem:[#allocation3]] %s2
  $region1: #{tpu_custom_call.1} parent=0
    #allocation4 [shape = 'u8[16384]{0}', space=vmem, size = 0x4000, scoped, tag = 'input window, operand 0']
    #allocation5 [shape = 's32[2]{0}', space=sflag, size = 0x8, scoped, tag = 'scoped memory for tpu_custom_call.1']
    #allocation6 [shape = 's32[2]{0}', space=sflag, size = 0x8, scoped, tag = 'scoped memory for tpu_custom_call.1']
    #allocation7 [shape = 'u8[16384]{0}', space=vmem, size = 0x4000, scoped, tag = 'output window, operand 0']
    %10 = vsyncpa [#allocation5], 0
    %s11 = scalar_lea.sflag [#allocation5], 1
    %12 = vsyncpa %s11, 0
    %13 = vsyncpa [#allocation6], 0
    %s14 = scalar_lea.sflag [#allocation6], 1
    %15 = vsyncpa %s14, 0
    loop: start=0, step=1, limit=4
    $region2: #{tpu_custom_call.1} parent=1 // loop_pre_header
      _
    $region3: #{tpu_custom_call.1} parent=1 // loop_header
      %s17 = sphi 0, %s21
      %p18 = scmp.ge.s32.totalorder %s17, 4
      %s27 = sphi 0, %s29
      %s30 = sphi 0, %s27
      %s31 = sphi 0, %s30
      %s47 = sphi 0, %s31
      %s51 = sphi 0, %s51
      %s53 = sphi 0, %s51
      %s54 = sphi 0, %s53
      %s68 = sphi 0, %s54
      %s72 = sphi 0, %s72
      %s74 = sphi 0, %s72
      %s75 = sphi 0, %s74
      %s89 = sphi 0, %s75
      %s95 = sphi 0, %s97
      %s98 = sphi 0, %s95
      %s99 = sphi 0, %s98
      %s115 = sphi 0, %s99
    $region4: #{tpu_custom_call.1} parent=1 // loop_header_branch
      %20 = sbr.rel (%p18) target = $region8
    $region5: #{tpu_custom_call.1} parent=1 // loop_body
      %s22 = ssub.s32 %s17, 1
      %s23 = ssub.s32 %s17, 2
      %s24 = sadd.s32 %s17, 1
      %s25 = ssub.s32 %s17, %s24
      %p26 = scmp.eq.s32.totalorder %s25, 0
      %s28 = sadd.s32 %s27, 1
      %s29 = scalar_select %p26, %s27, %s28
      %p32 = pneg %p26
      %p33 = scmp.eq.s32.totalorder %s17, 1
      %p34 = por %p32, %p33
      %p35 = scmp.ne.s32.totalorder %s27, %s30
      %p36 = scmp.eq.s32.totalorder %s17, 0
      %p37 = por %p35, %p36
      %p38 = scmp.ne.s32.totalorder %s27, %s30
      %p39 = scmp.eq.s32.totalorder %s22, 1
      %p40 = por %p38, %p39
      %p41 = scmp.ne.s32.totalorder %s30, %s31
      %p42 = scmp.eq.s32.totalorder %s22, 0
      %p43 = por %p41, %p42
      %p44 = scmp.ne.s32.totalorder %s30, %s31
      %p45 = scmp.eq.s32.totalorder %s23, 1
      %p46 = por %p44, %p45
      %p48 = scmp.ne.s32.totalorder %s31, %s47
      %p49 = scmp.eq.s32.totalorder %s23, 0
      %p50 = por %p48, %p49
      %s52 = sadd.s32 %s51, 1
      %p55 = scmp.eq.s32.totalorder %s17, 1
      %p56 = scmp.ne.s32.totalorder %s51, %s53
      %p57 = scmp.eq.s32.totalorder %s17, 0
      %p58 = por %p56, %p57
      %p59 = scmp.ne.s32.totalorder %s51, %s53
      %p60 = scmp.eq.s32.totalorder %s22, 1
      %p61 = por %p59, %p60
      %p62 = scmp.ne.s32.totalorder %s53, %s54
      %p63 = scmp.eq.s32.totalorder %s22, 0
      %p64 = por %p62, %p63
      %p65 = scmp.ne.s32.totalorder %s53, %s54
      %p66 = scmp.eq.s32.totalorder %s23, 1
      %p67 = por %p65, %p66
      %p69 = scmp.ne.s32.totalorder %s54, %s68
      %p70 = scmp.eq.s32.totalorder %s23, 0
      %p71 = por %p69, %p70
      %s73 = sadd.s32 %s72, 1
      %p76 = scmp.eq.s32.totalorder %s17, 1
      %p77 = scmp.ne.s32.totalorder %s72, %s74
      %p78 = scmp.eq.s32.totalorder %s17, 0
      %p79 = por %p77, %p78
      %p80 = scmp.ne.s32.totalorder %s72, %s74
      %p81 = scmp.eq.s32.totalorder %s22, 1
      %p82 = por %p80, %p81
      %p83 = scmp.ne.s32.totalorder %s74, %s75
      %p84 = scmp.eq.s32.totalorder %s22, 0
      %p85 = por %p83, %p84
      %p86 = scmp.ne.s32.totalorder %s74, %s75
      %p87 = scmp.eq.s32.totalorder %s23, 1
      %p88 = por %p86, %p87
      %p90 = scmp.ne.s32.totalorder %s75, %s89
      %p91 = scmp.eq.s32.totalorder %s23, 0
      %p92 = por %p90, %p91
      %s93 = ssub.s32 %s17, %s24
      %p94 = scmp.eq.s32.totalorder %s93, 0
      %s96 = sadd.s32 %s95, 1
      %s97 = scalar_select %p94, %s95, %s96
      %p100 = pneg %p94
      %p101 = scmp.eq.s32.totalorder %s17, 1
      %p102 = por %p100, %p101
      %p103 = scmp.ne.s32.totalorder %s95, %s98
      %p104 = scmp.eq.s32.totalorder %s17, 0
      %p105 = por %p103, %p104
      %p106 = scmp.ne.s32.totalorder %s95, %s98
      %p107 = scmp.eq.s32.totalorder %s22, 1
      %p108 = por %p106, %p107
      %p109 = scmp.ne.s32.totalorder %s98, %s99
      %p110 = scmp.eq.s32.totalorder %s22, 0
      %p111 = por %p109, %p110
      %p112 = scmp.ne.s32.totalorder %s98, %s99
      %p113 = scmp.eq.s32.totalorder %s23, 1
      %p114 = por %p112, %p113
      %p116 = scmp.ne.s32.totalorder %s99, %s115
      %p117 = scmp.eq.s32.totalorder %s23, 0
      %p118 = por %p116, %p117
      %p119 = scmp.le.s32.totalorder 1, %s17
      %p120 = scmp.lt.s32.totalorder %s17, 3
      %p121 = pnand %p119, %p120
      %p122 = pneg %p121
      // Predicated region
      $region9: #{tpu_custom_call.1} parent=5 // pred_check
        _
      $region10: #{tpu_custom_call.1} parent=5 // pred_check_branch
        %124 = sbr.rel (%p121) target = $region12
      $region11: #{tpu_custom_call.1} parent=5 // pred_region
        %s125 = ssub.s32 %s17, 1
        // Predicated region
        $region13: #{tpu_custom_call.1} parent=11 // pred_check
          %p126 = pneg %p64
        $region14: #{tpu_custom_call.1} parent=11 // pred_check_branch
          %128 = sbr.rel (%p126) target = $region16
        $region15: #{tpu_custom_call.1} parent=11 // pred_region
          _
        $region16: #{tpu_custom_call.1} parent=11 // pred_fallthru
          _
        // Predicated region
        $region17: #{tpu_custom_call.1} parent=11 // pred_check
          %p129 = pneg %p85
        $region18: #{tpu_custom_call.1} parent=11 // pred_check_branch
          %131 = sbr.rel (%p129) target = $region20
        $region19: #{tpu_custom_call.1} parent=11 // pred_region
          _
        $region20: #{tpu_custom_call.1} parent=11 // pred_fallthru
          _
      $region12: #{tpu_custom_call.1} parent=5 // pred_fallthru
        _
      %p132 = scmp.lt.s32.totalorder %s17, 2
      // Predicated region
      $region21: #{tpu_custom_call.1} parent=5 // pred_check
        %p133 = pneg %p132
      $region22: #{tpu_custom_call.1} parent=5 // pred_check_branch
        %135 = sbr.rel (%p133) target = $region24
      $region23: #{tpu_custom_call.1} parent=5 // pred_region
        // Predicated region
        $region25: #{tpu_custom_call.1} parent=23 // pred_check
          %p136 = pneg %p37
        $region26: #{tpu_custom_call.1} parent=23 // pred_check_branch
          %138 = sbr.rel (%p136) target = $region28
        $region27: #{tpu_custom_call.1} parent=23 // pred_region
          %s139 = sand.u32 %s27, 1
          %s140 = scalar_lea.sflag [#allocation5], %s139
          %s141 = sand.u32 %s27, 1
          %s142 = smul.addr %s141, 16
          %s143 = scalar_lea.vmem [#allocation4], %s142
          %s144 = smul.u32 2, %s17
          %s146 = ssub.s32 256, 256
          %147 = vsyncadd %s140, %s146
          %s148 = smul.addr %s144, 128
          %s149 = scalar_lea.hbm %s0, %s148
          %s150 = sshll.u32 %s143, 4
          %s151 = int_to_ptr.vmem [resolvable:$true] %s150
          %156 = dma.hbm_to_vmem [thread:$0]  %s149, 256, %s151, %s140, 128, 128, 8
        $region28: #{tpu_custom_call.1} parent=23 // pred_fallthru
          _
      $region24: #{tpu_custom_call.1} parent=5 // pred_fallthru
        _
      %p157 = scmp.le.s32.totalorder 1, %s17
      %p158 = scmp.lt.s32.totalorder %s17, 3
      %p159 = pnand %p157, %p158
      %p160 = pneg %p159
      // Predicated region
      $region29: #{tpu_custom_call.1} parent=5 // pred_check
        _
      $region30: #{tpu_custom_call.1} parent=5 // pred_check_branch
        %162 = sbr.rel (%p159) target = $region32
      $region31: #{tpu_custom_call.1} parent=5 // pred_region
        %s163 = ssub.s32 %s17, 1
        %s164 = sand.u32 %s30, 1
        %s165 = scalar_lea.sflag [#allocation5], %s164
        %s166 = sand.u32 %s30, 1
        %s167 = smul.addr %s166, 16
        %s168 = scalar_lea.vmem [#allocation4], %s167
        // Predicated region
        $region33: #{tpu_custom_call.1} parent=31 // pred_check
          %p169 = pneg %p43
        $region34: #{tpu_custom_call.1} parent=31 // pred_check_branch
          %171 = sbr.rel (%p169) target = $region36
        $region35: #{tpu_custom_call.1} parent=31 // pred_region
          %172 = dma.done %s165, 256
        $region36: #{tpu_custom_call.1} parent=31 // pred_fallthru
          _
        %s173 = sand.u32 %s30, 1
        %s174 = scalar_lea.sflag [#allocation5], %s173
        %s175 = sand.u32 %s30, 1
        %s176 = smul.addr %s175, 16
        %s177 = scalar_lea.vmem [#allocation4], %s176
        %p178 = pneg %p43
        %p179 = pneg %p40
        %p180 = pneg %p64
        %p181 = pneg %p61
        %p182 = pneg %p85
        %p183 = pneg %p82
        %p184 = pneg %p111
        %p185 = pneg %p108
        %s186 = sand.u32 %s98, 1
        %s187 = scalar_lea.sflag [#allocation6], %s186
        %s188 = sand.u32 %s98, 1
        %s189 = smul.addr %s188, 16
        %s190 = scalar_lea.vmem [#allocation7], %s189
        %s191 = smul.u32 2, %s22
        %s192 = smul.u32 2, %s22
        %v193 = vld [vmem:[%s168] sm:$0xff]
        %v194 = vld [vmem:[%s168 + $0x8] sm:$0xff]
        %s195 = sld [smem:[#allocation2]]
        %v196 = vstv %s195
        %v197 = vmul.f32 %v193, %v196
        %v198 = vmul.f32 %v194, %v196
        %s199 = sld [smem:[#allocation3]]
        %v200 = vstv %s199
        %v201 = vadd.f32 %v197, %v200
        %v202 = vadd.f32 %v198, %v200
        %203 = vst [vmem:[%s190] sm:$0xff] %v201
        %204 = vst [vmem:[%s190 + $0x8] sm:$0xff] %v202
        %s205 = sand.u32 %s98, 1
        %s206 = scalar_lea.sflag [#allocation6], %s205
        %s207 = sand.u32 %s98, 1
        %s208 = smul.addr %s207, 16
        %s209 = scalar_lea.vmem [#allocation7], %s208
        // Predicated region
        $region37: #{tpu_custom_call.1} parent=31 // pred_check
          %p210 = pneg %p108
        $region38: #{tpu_custom_call.1} parent=31 // pred_check_branch
          %212 = sbr.rel (%p210) target = $region40
        $region39: #{tpu_custom_call.1} parent=31 // pred_region
          %s213 = smul.u32 2, %s22
          %s215 = ssub.s32 256, 256
          %216 = vsyncadd %s206, %s215
          %s217 = smul.addr %s213, 128
          %s218 = scalar_lea.hbm %s3, %s217
          %s219 = sshll.u32 %s209, 4
          %s220 = int_to_ptr.vmem [resolvable:$true] %s219
          %225 = dma.vmem_to_hbm [thread:$0]  %s220, 256, %s218, %s206, 128, 128, 8
        $region40: #{tpu_custom_call.1} parent=31 // pred_fallthru
          _
      $region32: #{tpu_custom_call.1} parent=5 // pred_fallthru
        _
      %p226 = scmp.le.s32.totalorder 2, %s17
      // Predicated region
      $region41: #{tpu_custom_call.1} parent=5 // pred_check
        %p227 = pneg %p226
      $region42: #{tpu_custom_call.1} parent=5 // pred_check_branch
        %229 = sbr.rel (%p227) target = $region44
      $region43: #{tpu_custom_call.1} parent=5 // pred_region
        %s230 = ssub.s32 %s17, 2
        // Predicated region
        $region45: #{tpu_custom_call.1} parent=43 // pred_check
          %p231 = pneg %p114
        $region46: #{tpu_custom_call.1} parent=43 // pred_check_branch
          %233 = sbr.rel (%p231) target = $region48
        $region47: #{tpu_custom_call.1} parent=43 // pred_region
          %s234 = sand.u32 %s99, 1
          %s235 = scalar_lea.sflag [#allocation6], %s234
          %s236 = sand.u32 %s99, 1
          %s237 = smul.addr %s236, 16
          %s238 = scalar_lea.vmem [#allocation7], %s237
          %239 = dma.done %s235, 256
        $region48: #{tpu_custom_call.1} parent=43 // pred_fallthru
          _
      $region44: #{tpu_custom_call.1} parent=5 // pred_fallthru
        _
    $region6: #{tpu_custom_call.1} parent=1 // loop_footer
      %s21 = sadd.s32 1, %s17
    $region7: #{tpu_custom_call.1} parent=1 // loop_footer_branch
      %16 = sbr.rel target = $region3
    $region8: #{tpu_custom_call.1} parent=1 // loop_exit
      _
    %240 = vsyncpa [#allocation5], 1
    %s241 = scalar_lea.sflag [#allocation5], 1
    %242 = vsyncpa %s241, 1
    %243 = vsyncpa [#allocation6], 1
    %s244 = scalar_lea.sflag [#allocation6], 1
    %245 = vsyncpa %s244, 1

</llo_original>
